<compile_context>
chip_gen: v7x
topology: tpu7x:2x2x1
jax: 0.10.0
libtpu: 0.0.40
codegen_flags: <defaults>
</compile_context>

<pallas_src>
import math

import numpy as np
import jax
import jax.numpy as jnp
from jax.experimental import pallas as pl
from jax.experimental.pallas import tpu as pltpu

_LANES = 128
_SUBLANES = 8


def _round_up(x, m):
    return -(-x // m) * m


# ---------------------------------------------------------------------------
# Kernels
# ---------------------------------------------------------------------------
def _dense_kernel(pred_ref, target_ref, dft_ref, out_ref):
    # pred_ref/target_ref : (TB, H*W)       flattened images
    # dft_ref             : (H*W, 2*NF)     combined 2-D rDFT, [real | imag]
    # out_ref             : (1, 1, NF)      running sum_b |rfft2(pred-target)|
    @pl.when(pl.program_id(1) == 0)
    def _():
        out_ref[...] = jnp.zeros_like(out_ref)

    nf = out_ref.shape[-1]
    # Fused subtraction (VPU): pred - target never touches HBM.
    d = pred_ref[...] - target_ref[...]                       # (TB, H*W)
    # Single dense rfft2 matmul: K = H*W fully feeds the MXU for small images.
    y = jnp.dot(d, dft_ref[...], preferred_element_type=jnp.float32)
    yr = y[:, :nf]                                            # lane-aligned split
    yi = y[:, nf:]
    mag = jnp.sqrt(yr * yr + yi * yi)                         # (TB, NF)
    # Radial weight factored out entirely; just accumulate the per-frequency sum.
    out_ref[...] += jnp.sum(mag, axis=0)[None, None, :]


def _separable_kernel(pred_ref, target_ref, cw_ref, c_ref, s_ref, cps_ref,
                      out_ref):
    # pred_ref/target_ref : (TB, H, W)
    # cw_ref              : (W, 2*WFP)   width rDFT [cos | -sin], zero-padded cols
    # c_ref/s_ref/cps_ref : (H, H)       cos / sin / cos+sin height DFT blocks
    # out_ref             : (1, H, WFP)  running sum_b |rfft2(pred-target)|
    @pl.when(pl.program_id(1) == 0)
    def _():
        out_ref[...] = jnp.zeros_like(out_ref)

    tb, h, w = pred_ref.shape
    wfp = out_ref.shape[-1]

    d = (pred_ref[...] - target_ref[...]).reshape(tb * h, w)  # view when H % 8 == 0
    # Width rfft: one MXU matmul for all TB*H rows, lane-padded output.
    x = jnp.dot(d, cw_ref[...], preferred_element_type=jnp.float32)  # (TB*H, 2*WFP)

    cm = c_ref[...]
    sm = s_ref[...]
    cpsm = cps_ref[...]

    acc = jnp.zeros((h, wfp), jnp.float32)
    for b in range(tb):                       # static unroll; TB is kept small here
        xb = x[b * h:(b + 1) * h, :]          # static slab slice
        xr = xb[:, :wfp]                      # lane-aligned real/imag split
        xi = xb[:, wfp:]
        # Height FFT, Karatsuba / 3-multiply complex form:
        #   Yr = C@xr + S@xi ,  Yi = C@xi - S@xr
        t1 = jnp.dot(cm, xr, preferred_element_type=jnp.float32)
        t2 = jnp.dot(sm, xi, preferred_element_type=jnp.float32)
        t3 = jnp.dot(cpsm, xi - xr, preferred_element_type=jnp.float32)
        yr = t1 + t2
        yi = t3 + t1 - t2
        acc = acc + jnp.sqrt(yr * yr + yi * yi)
    out_ref[...] += acc[None]


# ---------------------------------------------------------------------------
# Host-side constants (depend only on H, W; built in float64)
# ---------------------------------------------------------------------------
def _dense_dft_matrix(h, w, wf, wf_pad):
    """(H*W, 2*H*wf_pad) matrix: d.flatten() @ M = [Re(rfft2(d)) | Im(rfft2(d))]."""
    m = np.arange(h, dtype=np.float64)
    n = np.arange(w, dtype=np.float64)
    u = np.arange(h, dtype=np.float64)
    k = np.arange(wf, dtype=np.float64)
    ang = 2.0 * np.pi * (u[:, None, None, None] * m[None, None, :, None] / h
                         + k[None, :, None, None] * n[None, None, None, :] / w)
    real = np.cos(ang)                                   # (h, wf, h, w)
    imag = -np.sin(ang)
    realp = np.zeros((h, wf_pad, h, w), dtype=np.float64)
    imagp = np.zeros((h, wf_pad, h, w), dtype=np.float64)
    realp[:, :wf] = real
    imagp[:, :wf] = imag
    nf = h * wf_pad
    dft = np.concatenate([realp.reshape(nf, h * w),
                          imagp.reshape(nf, h * w)], axis=0).T
    return dft                                           # (h*w, 2*nf)


def _separable_dft_matrices(h, w, wf, wf_pad):
    n = np.arange(w, dtype=np.float64)[:, None]
    k = np.arange(wf, dtype=np.float64)[None, :]
    ang_w = 2.0 * np.pi * n * k / w
    cw = np.zeros((w, 2 * wf_pad), dtype=np.float64)     # [cos | -sin], zero-padded
    cw[:, :wf] = np.cos(ang_w)
    cw[:, wf_pad:wf_pad + wf] = -np.sin(ang_w)

    uu = np.arange(h, dtype=np.float64)[:, None]
    mm = np.arange(h, dtype=np.float64)[None, :]
    ang_h = 2.0 * np.pi * uu * mm / h
    ch = np.cos(ang_h)
    sh = np.sin(ang_h)
    return cw, ch, sh, ch + sh


def _radial_weight(h, w, wf):
    y = np.arange(h, dtype=np.float64)[:, None]
    x = np.arange(wf, dtype=np.float64)[None, :]
    dist = np.sqrt((y - h // 2) ** 2 + x ** 2)
    return np.clip(dist / max(h, w) * 2.0, 0.1, 1.0)     # (h, wf)


# ---------------------------------------------------------------------------
# Hardware-aware sizing helpers
# ---------------------------------------------------------------------------
def _num_tensorcores():
    # v7x has 2 TensorCores per chip; v5e/v6e have 1.  A 2-way split on a
    # single-core chip only adds padding, so keep it at 1 there.
    try:
        kind = jax.devices()[0].device_kind.lower()
    except Exception:
        return 1
    return 2 if "v7" in kind else 1


def _vmem_limit_bytes():
    cap = None
    try:
        cap = getattr(pltpu.get_tpu_info(), "vmem_capacity_bytes", None)
    except Exception:
        cap = None
    if not cap:
        cap = 64 * 1024 * 1024        # conservative default = v7x per-core VMEM
    # 3/4 of physical, capped at 96 MiB (leaves headroom on 128 MiB v5e/v6e).
    return int(min(cap * 3 // 4, 96 * 1024 * 1024))


# ---------------------------------------------------------------------------
# Public entry point
# ---------------------------------------------------------------------------
def frequency_loss(pred, target, loss_weight=1.0, reduction="mean"):
    """Pallas TPU implementation of FrequencyLoss.forward ('mean' / 'sum')."""
    assert pred.shape == target.shape and pred.ndim == 4
    b, c, h, w = pred.shape
    wf = w // 2 + 1
    bc = b * c

    pred = pred.astype(jnp.float32)
    target = target.astype(jnp.float32)

    n_split = max(1, min(_num_tensorcores(), bc))
    vmem_limit = _vmem_limit_bytes()
    headroom = 4 * 1024 * 1024
    bc_per_split = -(-bc // n_split)
    weight = _radial_weight(h, w, wf)                    # (h, wf), float64

    # Dense 2-D-DFT path for small images (MXU otherwise starves at K=W).
    use_dense = False
    if h * w <= 1024:
        lane_q = _LANES // math.gcd(h, _LANES)
        wf_pad_d = _round_up(wf, lane_q)                 # smallest pad: h*wf_pad % 128 == 0
        nf = h * wf_pad_d
        use_dense = (h * w) * (2 * nf) <= (1 << 22)      # keep DFT matrix <= 16 MiB f32

    if use_dense:
        dft = jnp.asarray(_dense_dft_matrix(h, w, wf, wf_pad_d), dtype=jnp.float32)

        # TB from full VMEM footprint: 2 inputs x 2 buffers + d + y/yr/yi/mag.
        resident = int(dft.size) * 4 + 2 * nf * 4
        per_img = 20 * h * w + 24 * nf
        budget = max(vmem_limit - resident - headroom, per_img)
        tb = int(max(1, min(budget // per_img, 512, bc_per_split)))
        tb = _round_up(tb, _SUBLANES)                    # (8,128) rule on the block

        bc_pad = n_split * tb * (-(-bc // (n_split * tb)))
        inner = bc_pad // (n_split * tb)

        p2 = pred.reshape(bc, h * w)                     # free metadata reshape in HBM
        t2 = target.reshape(bc, h * w)
        if bc_pad != bc:                                 # zero rows -> zero diff -> add 0
            p2 = jnp.pad(p2, ((0, bc_pad - bc), (0, 0)))
            t2 = jnp.pad(t2, ((0, bc_pad - bc), (0, 0)))

        partials = pl.pallas_call(
            _dense_kernel,
            out_shape=jax.ShapeDtypeStruct((n_split, 1, nf), jnp.float32),
            grid_spec=pltpu.PrefetchScalarGridSpec(
                num_scalar_prefetch=0,
                grid=(n_split, inner),
                in_specs=[
                    pl.BlockSpec((tb, h * w), lambda p, i: (p * inner + i, 0)),
                    pl.BlockSpec((tb, h * w), lambda p, i: (p * inner + i, 0)),
                    pl.BlockSpec((h * w, 2 * nf), lambda p, i: (0, 0)),
                ],
                out_specs=pl.BlockSpec((1, 1, nf), lambda p, i: (p, 0, 0)),
            ),
            compiler_params=pltpu.CompilerParams(
                dimension_semantics=("parallel", "arbitrary"),
                vmem_limit_bytes=vmem_limit,
            ),
        )(p2, t2, dft)

        sum_mag = jnp.sum(partials, axis=(0, 1))                     # (nf,)
        wpad = np.zeros((h, wf_pad_d), dtype=np.float64)
        wpad[:, :wf] = weight
        total = jnp.sum(sum_mag * jnp.asarray(wpad.reshape(nf), dtype=jnp.float32))
    else:
        wf_pad = _round_up(wf, _LANES)
        cw_np, ch_np, sh_np, cps_np = _separable_dft_matrices(h, w, wf, wf_pad)
        cw = jnp.asarray(cw_np, jnp.float32)
        ch = jnp.asarray(ch_np, jnp.float32)
        sh = jnp.asarray(sh_np, jnp.float32)
        cps = jnp.asarray(cps_np, jnp.float32)

        resident = (int(cw.size) + 3 * h * h + 2 * h * wf_pad) * 4
        per_img = 20 * h * w + 32 * h * wf_pad
        budget = max(vmem_limit - resident - headroom, per_img)
        tb = int(max(1, min(budget // per_img, 8, bc_per_split)))    # small static unroll

        bc_pad = n_split * tb * (-(-bc // (n_split * tb)))
        inner = bc_pad // (n_split * tb)

        p3 = pred.reshape(bc, h, w)
        t3 = target.reshape(bc, h, w)
        if bc_pad != bc:
            pad = ((0, bc_pad - bc), (0, 0), (0, 0))
            p3 = jnp.pad(p3, pad)
            t3 = jnp.pad(t3, pad)

        partials = pl.pallas_call(
            _separable_kernel,
            out_shape=jax.ShapeDtypeStruct((n_split, h, wf_pad), jnp.float32),
            grid_spec=pltpu.PrefetchScalarGridSpec(
                num_scalar_prefetch=0,
                grid=(n_split, inner),
                in_specs=[
                    pl.BlockSpec((tb, h, w), lambda p, i: (p * inner + i, 0, 0)),
                    pl.BlockSpec((tb, h, w), lambda p, i: (p * inner + i, 0, 0)),
                    pl.BlockSpec((w, 2 * wf_pad), lambda p, i: (0, 0)),
                    pl.BlockSpec((h, h), lambda p, i: (0, 0)),
                    pl.BlockSpec((h, h), lambda p, i: (0, 0)),
                    pl.BlockSpec((h, h), lambda p, i: (0, 0)),
                ],
                out_specs=pl.BlockSpec((1, h, wf_pad), lambda p, i: (p, 0, 0)),
            ),
            compiler_params=pltpu.CompilerParams(
                dimension_semantics=("parallel", "arbitrary"),
                vmem_limit_bytes=vmem_limit,
            ),
        )(p3, t3, cw, ch, sh, cps)

        sum_mag = jnp.sum(partials, axis=0)                          # (h, wf_pad)
        wpad = np.zeros((h, wf_pad), dtype=np.float64)
        wpad[:, :wf] = weight
        total = jnp.sum(sum_mag * jnp.asarray(wpad, dtype=jnp.float32))

    if reduction == "mean":
        loss = total / (bc * h * wf)
    elif reduction == "sum":
        loss = total
    else:
        # TODO(synk): reduction='none' returns the full (B, C, H, Wf) weighted_diff
        # tensor; not produced by this sum-accumulating kernel variant.
        raise NotImplementedError("only 'mean' and 'sum' reductions supported")
    return loss_weight * loss


# ---------------------------------------------------------------------------
# Pure-JAX reference and self-test
# ---------------------------------------------------------------------------
def _reference_loss(pred, target, loss_weight=1.0):
    pred_freq = jnp.fft.rfft2(pred.astype(jnp.float32))
    target_freq = jnp.fft.rfft2(target.astype(jnp.float32))
    freq_diff = jnp.abs(pred_freq - target_freq)
    _, _, h, w = pred.shape
    y_grid, x_grid = jnp.meshgrid(jnp.arange(h), jnp.arange(w // 2 + 1),
                                  indexing="ij")
    dist = jnp.sqrt((y_grid - h // 2) ** 2.0 + (x_grid - 0) ** 2.0)
    weight = jnp.clip(dist / max(h, w) * 2.0, 0.1, 1.0)
    return loss_weight * jnp.mean(freq_diff * weight[None, None])


if __name__ == "__main__":
    key = jax.random.PRNGKey(0)
    k1, k2, k3, k4 = jax.random.split(key, 4)

    # Small shapes consistent with the module (exercises the dense path).
    B, C, H, W = 2, 4, 16, 16
    pred = jax.random.normal(k1, (B, C, H, W), dtype=jnp.float32)
    target = jax.random.normal(k2, (B, C, H, W), dtype=jnp.float32)
    loss = jax.block_until_ready(
        frequency_loss(pred, target, loss_weight=1.0, reduction="mean"))
    ref = jax.block_until_ready(_reference_loss(pred, target, loss_weight=1.0))
    np.testing.assert_allclose(np.asarray(loss), np.asarray(ref),
                               rtol=1e-4, atol=1e-4)

    # Larger spatial size (exercises the separable / Karatsuba path).
    B2, C2, H2, W2 = 2, 2, 64, 64
    pred2 = jax.random.normal(k3, (B2, C2, H2, W2), dtype=jnp.float32)
    target2 = jax.random.normal(k4, (B2, C2, H2, W2), dtype=jnp.float32)
    loss2 = jax.block_until_ready(
        frequency_loss(pred2, target2, loss_weight=1.0, reduction="mean"))
    ref2 = jax.block_until_ready(_reference_loss(pred2, target2, loss_weight=1.0))
    np.testing.assert_allclose(np.asarray(loss2), np.asarray(ref2),
                               rtol=1e-4, atol=1e-4)

    print("KERNEL_OK")
</pallas_src>

<mosaic_0001>
module attributes {stable_mosaic.version = 11 : i64} {
  func.func @_dense_kernel(%arg0: i32, %arg1: i32, %arg2: memref<8x256xf32, #tpu.memory_space<vmem>>, %arg3: memref<8x256xf32, #tpu.memory_space<vmem>>, %arg4: memref<256x512xf32, #tpu.memory_space<vmem>>, %arg5: memref<1x1x256xf32, #tpu.memory_space<vmem>>) attributes {dimension_semantics = [#tpu.dimension_semantics<parallel>, #tpu.dimension_semantics<arbitrary>], iteration_bounds = array<i64: 1, 1>, scalar_prefetch = 0 : i64, scratch_operands = 0 : i64, tpu.core_type = #tpu.core_type<tc>, window_params = [{transform_indices = @transform_0, window_bounds = array<i64: 8, 256>}, {transform_indices = @transform_1, window_bounds = array<i64: 8, 256>}, {pipeline_mode = #tpu.pipeline_mode<synchronous>, transform_indices = @transform_2, window_bounds = array<i64: 256, 512>}, {transform_indices = @transform_3, window_bounds = array<i64: 1, 1, 256>}]} {
    %c0_i32 = arith.constant 0 : i32
    %0 = arith.cmpi eq, %arg1, %c0_i32 : i32
    %1 = arith.extui %0 : i1 to i32
    %c0_i32_0 = arith.constant 0 : i32
    %2 = arith.cmpi ne, %1, %c0_i32_0 : i32
    scf.if %2 {
      %cst_13 = arith.constant 0.000000e+00 : f32
      %19 = vector.broadcast %cst_13 : f32 to vector<1x1x256xf32>
      %c0_14 = arith.constant 0 : index
      %c0_15 = arith.constant 0 : index
      %c0_16 = arith.constant 0 : index
      %20 = vector.load %arg5[%c0_14, %c0_15, %c0_16] : memref<1x1x256xf32, #tpu.memory_space<vmem>>, vector<1x1x256xf32>
      tpu.vector_store %arg5[%c0_14, %c0_15, %c0_16], %19 {strides = array<i32>} : memref<1x1x256xf32, #tpu.memory_space<vmem>>, vector<1x1x256xf32>,
    } else {
    }
    %c0 = arith.constant 0 : index
    %c0_1 = arith.constant 0 : index
    %3 = vector.load %arg2[%c0, %c0_1] : memref<8x256xf32, #tpu.memory_space<vmem>>, vector<8x256xf32>
    %c0_2 = arith.constant 0 : index
    %c0_3 = arith.constant 0 : index
    %4 = vector.load %arg3[%c0_2, %c0_3] : memref<8x256xf32, #tpu.memory_space<vmem>>, vector<8x256xf32>
    %5 = arith.subf %3, %4 : vector<8x256xf32>
    %c0_4 = arith.constant 0 : index
    %c0_5 = arith.constant 0 : index
    %6 = vector.load %arg4[%c0_4, %c0_5] : memref<256x512xf32, #tpu.memory_space<vmem>>, vector<256x512xf32>
    %cst = arith.constant dense<0.000000e+00> : vector<8x512xf32>
    %7 = tpu.matmul %5, %6, %cst {dimension_numbers = #tpu.dot_dimension_numbers<[1], [0], [0], [1], [0, 0, 1, 1], [], []>} : vector<8x256xf32>, vector<256x512xf32>, vector<8x512xf32> -> vector<8x512xf32>
    %8 = vector.extract_strided_slice %7 {offsets = [0, 0], sizes = [8, 256], strides = [1, 1]} : vector<8x512xf32> to vector<8x256xf32>
    %9 = vector.extract_strided_slice %7 {offsets = [0, 256], sizes = [8, 256], strides = [1, 1]} : vector<8x512xf32> to vector<8x256xf32>
    %10 = arith.mulf %8, %8 : vector<8x256xf32>
    %11 = arith.mulf %9, %9 : vector<8x256xf32>
    %12 = arith.addf %10, %11 : vector<8x256xf32>
    %13 = math.sqrt %12 : vector<8x256xf32>
    %c0_6 = arith.constant 0 : index
    %c0_7 = arith.constant 0 : index
    %c0_8 = arith.constant 0 : index
    %14 = vector.load %arg5[%c0_6, %c0_7, %c0_8] : memref<1x1x256xf32, #tpu.memory_space<vmem>>, vector<1x1x256xf32>
    %cst_9 = arith.constant dense<0.000000e+00> : vector<256xf32>
    %15 = vector.multi_reduction <add>, %13, %cst_9 [0] : vector<8x256xf32> to vector<256xf32>
    %16 = vector.shape_cast %15 : vector<256xf32> to vector<1x1x256xf32>
    %17 = arith.addf %14, %16 : vector<1x1x256xf32>
    %c0_10 = arith.constant 0 : index
    %c0_11 = arith.constant 0 : index
    %c0_12 = arith.constant 0 : index
    %18 = vector.load %arg5[%c0_10, %c0_11, %c0_12] : memref<1x1x256xf32, #tpu.memory_space<vmem>>, vector<1x1x256xf32>
    tpu.vector_store %arg5[%c0_10, %c0_11, %c0_12], %17 {strides = array<i32>} : memref<1x1x256xf32, #tpu.memory_space<vmem>>, vector<1x1x256xf32>,
    return
  }
  func.func @transform_0(%arg0: i32, %arg1: i32) -> (i32, i32) {
    %c1_i32 = arith.constant 1 : i32
    %0 = arith.muli %arg0, %c1_i32 : i32
    %1 = arith.addi %0, %arg1 : i32
    %c0_i32 = arith.constant 0 : i32
    %c0_i32_0 = arith.constant 0 : i32
    return %1, %c0_i32 : i32, i32
  }
  func.func @transform_1(%arg0: i32, %arg1: i32) -> (i32, i32) {
    %c1_i32 = arith.constant 1 : i32
    %0 = arith.muli %arg0, %c1_i32 : i32
    %1 = arith.addi %0, %arg1 : i32
    %c0_i32 = arith.constant 0 : i32
    %c0_i32_0 = arith.constant 0 : i32
    return %1, %c0_i32 : i32, i32
  }
  func.func @transform_2(%arg0: i32, %arg1: i32) -> (i32, i32) {
    %c0_i32 = arith.constant 0 : i32
    %c0_i32_0 = arith.constant 0 : i32
    %c0_i32_1 = arith.constant 0 : i32
    return %c0_i32, %c0_i32_0 : i32, i32
  }
  func.func @transform_3(%arg0: i32, %arg1: i32) -> (i32, i32, i32) {
    %c0_i32 = arith.constant 0 : i32
    %c0_i32_0 = arith.constant 0 : i32
    %c0_i32_1 = arith.constant 0 : i32
    return %arg0, %c0_i32, %c0_i32_0 : i32, i32, i32
  }
}

</mosaic_0001>

<llo_original>
// kernel: tpu_custom_call.1
$region0: #{tpu_custom_call.1}
  #allocation0 [shape = 'u32[]', space=smem, size = 0x4, offset = 0x4, fixed_abs, tag = 'smem constant byte address 0x4 - core index']
  #allocation1 [shape = 'u32[144,128]{1,0:T(1,128)}', space=vmem, size = 0x12000, scoped, tag = 'internal scratch']
  %s0 = inlined_call_operand.hbm [shape: f32[8,256], index: 0, kind: input, shape index: {}]
  %s1 = inlined_call_operand.hbm [shape: f32[8,256], index: 1, kind: input, shape index: {}]
  %s2 = inlined_call_operand.hbm [shape: f32[256,512], index: 2, kind: input, shape index: {}]
  %s3 = inlined_call_operand.hbm [shape: f32[1,1,256], index: 3, kind: output, shape index: {}]
  %s4 = sld [smem:[#allocation0]]
  $region38: #{tpu_custom_call.1} parent=0
    _
  %s6 = ssub.s32 1, %s4
  %s7 = scalar_select 0, %s6, %s4
  $region1: #{tpu_custom_call.1} parent=0
    #allocation2 [shape = 'u8[8192]{0}', space=vmem, size = 0x2000, scoped, tag = 'input window, operand 0, single buffered']
    #allocation3 [shape = 's32[1]{0}', space=sflag, size = 0x4, scoped, tag = 'scoped memory for tpu_custom_call.1']
    #allocation4 [shape = 's32[1]{0}', space=sflag, size = 0x4, scoped, tag = 'scoped memory for tpu_custom_call.1']
    #allocation5 [shape = 'u8[8192]{0}', space=vmem, size = 0x2000, scoped, tag = 'input window, operand 1, single buffered']
    #allocation6 [shape = 's32[1]{0}', space=sflag, size = 0x4, scoped, tag = 'scoped memory for tpu_custom_call.1']
    #allocation7 [shape = 'u8[524288]{0}', space=vmem, size = 0x80000, scoped, tag = 'input window, operand 2, single buffered']
    #allocation8 [shape = 'u8[1024]{0}', space=vmem, size = 0x400, scoped, tag = 'output window, operand 0, single buffered']
    %8 = vsyncpa [#allocation3], 0
    %9 = vsyncpa [#allocation6], 0
    %10 = vsyncpa [#allocation4], 0
    // Predicated region
    $region2: #{tpu_custom_call.1} parent=1 // pred_check
      _
    $region3: #{tpu_custom_call.1} parent=1 // pred_check_branch
      %12 = sbr.rel (0) target = $region5
    $region4: #{tpu_custom_call.1} parent=1 // pred_region
      %s13 = sadd.s32 0, 0
      %s15 = ssub.s32 256, 256
      %16 = vsyncadd [#allocation3], %s15
      %s17 = smul.addr %s13, 2
      %s18 = smul.addr %s17, 128
      %s19 = scalar_lea.hbm %s0, %s18
      %s21 = sshll.u32 [#allocation2], 4
      %s22 = int_to_ptr.vmem [resolvable:$true] %s21
      %24 = dma.hbm_to_vmem [thread:$0]  %s19, 256, %s22, [#allocation3]
    $region5: #{tpu_custom_call.1} parent=1 // pred_fallthru
      _
    // Predicated region
    $region6: #{tpu_custom_call.1} parent=1 // pred_check
      _
    $region7: #{tpu_custom_call.1} parent=1 // pred_check_branch
      %26 = sbr.rel (0) target = $region9
    $region8: #{tpu_custom_call.1} parent=1 // pred_region
      %s27 = sadd.s32 0, 0
      %s29 = ssub.s32 256, 256
      %30 = vsyncadd [#allocation6], %s29
      %s31 = smul.addr %s27, 2
      %s32 = smul.addr %s31, 128
      %s33 = scalar_lea.hbm %s1, %s32
      %s35 = sshll.u32 [#allocation5], 4
      %s36 = int_to_ptr.vmem [resolvable:$true] %s35
      %38 = dma.hbm_to_vmem [thread:$0]  %s33, 256, %s36, [#allocation6]
    $region9: #{tpu_custom_call.1} parent=1 // pred_fallthru
      _
    // Predicated region
    $region10: #{tpu_custom_call.1} parent=1 // pred_check
      _
    $region11: #{tpu_custom_call.1} parent=1 // pred_check_branch
      %40 = sbr.rel (0) target = $region13
    $region12: #{tpu_custom_call.1} parent=1 // pred_region
      %s42 = ssub.s32 16384, 16384
      %43 = vsyncadd [#allocation6], %s42
      %s44 = sshll.u32 [#allocation7], 4
      %s45 = int_to_ptr.vmem [resolvable:$true] %s44
      %50 = dma.hbm_to_vmem [thread:$0]  %s2, 16384, %s45, [#allocation6], 512, 512, 32
    $region13: #{tpu_custom_call.1} parent=1 // pred_fallthru
      _
    // Predicated region
    $region14: #{tpu_custom_call.1} parent=1 // pred_check
      _
    $region15: #{tpu_custom_call.1} parent=1 // pred_check_branch
      %52 = sbr.rel (0) target = $region17
    $region16: #{tpu_custom_call.1} parent=1 // pred_region
      %53 = dma.done [#allocation3], 256
    $region17: #{tpu_custom_call.1} parent=1 // pred_fallthru
      _
    // Predicated region
    $region18: #{tpu_custom_call.1} parent=1 // pred_check
      _
    $region19: #{tpu_custom_call.1} parent=1 // pred_check_branch
      %55 = sbr.rel (0) target = $region21
    $region20: #{tpu_custom_call.1} parent=1 // pred_region
      %56 = dma.done [#allocation6], 256
    $region21: #{tpu_custom_call.1} parent=1 // pred_fallthru
      _
    // Predicated region
    $region22: #{tpu_custom_call.1} parent=1 // pred_check
      _
    $region23: #{tpu_custom_call.1} parent=1 // pred_check_branch
      %58 = sbr.rel (0) target = $region25
    $region24: #{tpu_custom_call.1} parent=1 // pred_region
      %59 = dma.done [#allocation6], 16384
    $region25: #{tpu_custom_call.1} parent=1 // pred_fallthru
      _
    %s60 = sadd.s32 0, 0
    %s61 = sadd.s32 0, 0
    %p62 = scmp.eq.s32.totalorder 0, 0
    // Predicated region
    $region26: #{tpu_custom_call.1} parent=1 // pred_check
      %p63 = pneg %p62
    $region27: #{tpu_custom_call.1} parent=1 // pred_check_branch
      %65 = sbr.rel (%p63) target = $region29
    $region28: #{tpu_custom_call.1} parent=1 // pred_region
      %v66 = vlaneseq
      %vm67 = vcmp.ge.s32.totalorder %v66, 0
      %vm68 = vcmp.lt.s32.totalorder %v66, 256
      %vm69 = vmand %vm67, %vm68
      %70 = vst.msk [vmem:[#allocation8] sm:$0x3] %vm69, 0.0
    $region29: #{tpu_custom_call.1} parent=1 // pred_fallthru
      _
    %v71 = vld [vmem:[#allocation2] sm:$0xff]
    %v72 = vld [vmem:[#allocation2 + $0x8] sm:$0xff]
    %v73 = vld [vmem:[#allocation5] sm:$0xff]
    %v74 = vld [vmem:[#allocation5 + $0x8] sm:$0xff]
    %v75 = vsub.f32 %v71, %v73
    %v76 = vsub.f32 %v72, %v74
    %v77 = vld [vmem:[#allocation7] sm:$0xff]
    %v78 = vld [vmem:[#allocation7 + $0x8] sm:$0xff]
    %v79 = vld [vmem:[#allocation7 + $0x10] sm:$0xff]
    %v80 = vld [vmem:[#allocation7 + $0x18] sm:$0xff]
    %v81 = vld [vmem:[#allocation7 + $0x20] sm:$0xff]
    %v82 = vld [vmem:[#allocation7 + $0x28] sm:$0xff]
    %v83 = vld [vmem:[#allocation7 + $0x30] sm:$0xff]
    %v84 = vld [vmem:[#allocation7 + $0x38] sm:$0xff]
    %v85 = vld [vmem:[#allocation7 + $0x40] sm:$0xff]
    %v86 = vld [vmem:[#allocation7 + $0x48] sm:$0xff]
    %v87 = vld [vmem:[#allocation7 + $0x50] sm:$0xff]
    %v88 = vld [vmem:[#allocation7 + $0x58] sm:$0xff]
    %v89 = vld [vmem:[#allocation7 + $0x60] sm:$0xff]
    %v90 = vld [vmem:[#allocation7 + $0x68] sm:$0xff]
    %v91 = vld [vmem:[#allocation7 + $0x70] sm:$0xff]
    %v92 = vld [vmem:[#allocation7 + $0x78] sm:$0xff]
    %v93 = vld [vmem:[#allocation7 + $0x80] sm:$0xff]
    %v94 = vld [vmem:[#allocation7 + $0x88] sm:$0xff]
    %v95 = vld [vmem:[#allocation7 + $0x90] sm:$0xff]
    %v96 = vld [vmem:[#allocation7 + $0x98] sm:$0xff]
    %v97 = vld [vmem:[#allocation7 + $0xa0] sm:$0xff]
    %v98 = vld [vmem:[#allocation7 + $0xa8] sm:$0xff]
    %v99 = vld [vmem:[#allocation7 + $0xb0] sm:$0xff]
    %v100 = vld [vmem:[#allocation7 + $0xb8] sm:$0xff]
    %v101 = vld [vmem:[#allocation7 + $0xc0] sm:$0xff]
    %v102 = vld [vmem:[#allocation7 + $0xc8] sm:$0xff]
    %v103 = vld [vmem:[#allocation7 + $0xd0] sm:$0xff]
    %v104 = vld [vmem:[#allocation7 + $0xd8] sm:$0xff]
    %v105 = vld [vmem:[#allocation7 + $0xe0] sm:$0xff]
    %v106 = vld [vmem:[#allocation7 + $0xe8] sm:$0xff]
    %v107 = vld [vmem:[#allocation7 + $0xf0] sm:$0xff]
    %v108 = vld [vmem:[#allocation7 + $0xf8] sm:$0xff]
    %v109 = vld [vmem:[#allocation7 + $0x100] sm:$0xff]
    %v110 = vld [vmem:[#allocation7 + $0x108] sm:$0xff]
    %v111 = vld [vmem:[#allocation7 + $0x110] sm:$0xff]
    %v112 = vld [vmem:[#allocation7 + $0x118] sm:$0xff]
    %v113 = vld [vmem:[#allocation7 + $0x120] sm:$0xff]
    %v114 = vld [vmem:[#allocation7 + $0x128] sm:$0xff]
    %v115 = vld [vmem:[#allocation7 + $0x130] sm:$0xff]
    %v116 = vld [vmem:[#allocation7 + $0x138] sm:$0xff]
    %v117 = vld [vmem:[#allocation7 + $0x140] sm:$0xff]
    %v118 = vld [vmem:[#allocation7 + $0x148] sm:$0xff]
    %v119 = vld [vmem:[#allocation7 + $0x150] sm:$0xff]
    %v120 = vld [vmem:[#allocation7 + $0x158] sm:$0xff]
    %v121 = vld [vmem:[#allocation7 + $0x160] sm:$0xff]
    %v122 = vld [vmem:[#allocation7 + $0x168] sm:$0xff]
    %v123 = vld [vmem:[#allocation7 + $0x170] sm:$0xff]
    %v124 = vld [vmem:[#allocation7 + $0x178] sm:$0xff]
    %v125 = vld [vmem:[#allocation7 + $0x180] sm:$0xff]
    %v126 = vld [vmem:[#allocation7 + $0x188] sm:$0xff]
    %v127 = vld [vmem:[#allocation7 + $0x190] sm:$0xff]
    %v128 = vld [vmem:[#allocation7 + $0x198] sm:$0xff]
    %v129 = vld [vmem:[#allocation7 + $0x1a0] sm:$0xff]
    %v130 = vld [vmem:[#allocation7 + $0x1a8] sm:$0xff]
    %v131 = vld [vmem:[#allocation7 + $0x1b0] sm:$0xff]
    %v132 = vld [vmem:[#allocation7 + $0x1b8] sm:$0xff]
    %v133 = vld [vmem:[#allocation7 + $0x1c0] sm:$0xff]
    %v134 = vld [vmem:[#allocation7 + $0x1c8] sm:$0xff]
    %v135 = vld [vmem:[#allocation7 + $0x1d0] sm:$0xff]
    %v136 = vld [vmem:[#allocation7 + $0x1d8] sm:$0xff]
    %v137 = vld [vmem:[#allocation7 + $0x1e0] sm:$0xff]
    %v138 = vld [vmem:[#allocation7 + $0x1e8] sm:$0xff]
    %v139 = vld [vmem:[#allocation7 + $0x1f0] sm:$0xff]
    %v140 = vld [vmem:[#allocation7 + $0x1f8] sm:$0xff]
    %v141 = vld [vmem:[#allocation7 + $0x200] sm:$0xff]
    %v142 = vld [vmem:[#allocation7 + $0x208] sm:$0xff]
    %v143 = vld [vmem:[#allocation7 + $0x210] sm:$0xff]
    %v144 = vld [vmem:[#allocation7 + $0x218] sm:$0xff]
    %v145 = vld [vmem:[#allocation7 + $0x220] sm:$0xff]
    %v146 = vld [vmem:[#allocation7 + $0x228] sm:$0xff]
    %v147 = vld [vmem:[#allocation7 + $0x230] sm:$0xff]
    %v148 = vld [vmem:[#allocation7 + $0x238] sm:$0xff]
    %v149 = vld [vmem:[#allocation7 + $0x240] sm:$0xff]
    %v150 = vld [vmem:[#allocation7 + $0x248] sm:$0xff]
    %v151 = vld [vmem:[#allocation7 + $0x250] sm:$0xff]
    %v152 = vld [vmem:[#allocation7 + $0x258] sm:$0xff]
    %v153 = vld [vmem:[#allocation7 + $0x260] sm:$0xff]
    %v154 = vld [vmem:[#allocation7 + $0x268] sm:$0xff]
    %v155 = vld [vmem:[#allocation7 + $0x270] sm:$0xff]
    %v156 = vld [vmem:[#allocation7 + $0x278] sm:$0xff]
    %v157 = vld [vmem:[#allocation7 + $0x280] sm:$0xff]
    %v158 = vld [vmem:[#allocation7 + $0x288] sm:$0xff]
    %v159 = vld [vmem:[#allocation7 + $0x290] sm:$0xff]
    %v160 = vld [vmem:[#allocation7 + $0x298] sm:$0xff]
    %v161 = vld [vmem:[#allocation7 + $0x2a0] sm:$0xff]
    %v162 = vld [vmem:[#allocation7 + $0x2a8] sm:$0xff]
    %v163 = vld [vmem:[#allocation7 + $0x2b0] sm:$0xff]
    %v164 = vld [vmem:[#allocation7 + $0x2b8] sm:$0xff]
    %v165 = vld [vmem:[#allocation7 + $0x2c0] sm:$0xff]
    %v166 = vld [vmem:[#allocation7 + $0x2c8] sm:$0xff]
    %v167 = vld [vmem:[#allocation7 + $0x2d0] sm:$0xff]
    %v168 = vld [vmem:[#allocation7 + $0x2d8] sm:$0xff]
    %v169 = vld [vmem:[#allocation7 + $0x2e0] sm:$0xff]
    %v170 = vld [vmem:[#allocation7 + $0x2e8] sm:$0xff]
    %v171 = vld [vmem:[#allocation7 + $0x2f0] sm:$0xff]
    %v172 = vld [vmem:[#allocation7 + $0x2f8] sm:$0xff]
    %v173 = vld [vmem:[#allocation7 + $0x300] sm:$0xff]
    %v174 = vld [vmem:[#allocation7 + $0x308] sm:$0xff]
    %v175 = vld [vmem:[#allocation7 + $0x310] sm:$0xff]
    %v176 = vld [vmem:[#allocation7 + $0x318] sm:$0xff]
    %v177 = vld [vmem:[#allocation7 + $0x320] sm:$0xff]
    %v178 = vld [vmem:[#allocation7 + $0x328] sm:$0xff]
    %v179 = vld [vmem:[#allocation7 + $0x330] sm:$0xff]
    %v180 = vld [vmem:[#allocation7 + $0x338] sm:$0xff]
    %v181 = vld [vmem:[#allocation7 + $0x340] sm:$0xff]
    %v182 = vld [vmem:[#allocation7 + $0x348] sm:$0xff]
    %v183 = vld [vmem:[#allocation7 + $0x350] sm:$0xff]
    %v184 = vld [vmem:[#allocation7 + $0x358] sm:$0xff]
    %v185 = vld [vmem:[#allocation7 + $0x360] sm:$0xff]
    %v186 = vld [vmem:[#allocation7 + $0x368] sm:$0xff]
    %v187 = vld [vmem:[#allocation7 + $0x370] sm:$0xff]
    %v188 = vld [vmem:[#allocation7 + $0x378] sm:$0xff]
    %v189 = vld [vmem:[#allocation7 + $0x380] sm:$0xff]
    %v190 = vld [vmem:[#allocation7 + $0x388] sm:$0xff]
    %v191 = vld [vmem:[#allocation7 + $0x390] sm:$0xff]
    %v192 = vld [vmem:[#allocation7 + $0x398] sm:$0xff]
    %v193 = vld [vmem:[#allocation7 + $0x3a0] sm:$0xff]
    %v194 = vld [vmem:[#allocation7 + $0x3a8] sm:$0xff]
    %v195 = vld [vmem:[#allocation7 + $0x3b0] sm:$0xff]
    %v196 = vld [vmem:[#allocation7 + $0x3b8] sm:$0xff]
    %v197 = vld [vmem:[#allocation7 + $0x3c0] sm:$0xff]
    %v198 = vld [vmem:[#allocation7 + $0x3c8] sm:$0xff]
    %v199 = vld [vmem:[#allocation7 + $0x3d0] sm:$0xff]
    %v200 = vld [vmem:[#allocation7 + $0x3d8] sm:$0xff]
    %v201 = vld [vmem:[#allocation7 + $0x3e0] sm:$0xff]
    %v202 = vld [vmem:[#allocation7 + $0x3e8] sm:$0xff]
    %v203 = vld [vmem:[#allocation7 + $0x3f0] sm:$0xff]
    %v204 = vld [vmem:[#allocation7 + $0x3f8] sm:$0xff]
    %205 = vmatprep.subr.mxu0 %v78
    %206 = vmatpush1.msra.mxu0 %v77
    %207 = vmatprep.subr.mxu0 %v82
    %208 = vmatpush1.msra.mxu0 %v81
    %209 = vmatprep.subr.mxu0 %v86
    %210 = vmatpush1.msra.mxu0 %v85
    %211 = vmatprep.subr.mxu0 %v90
    %212 = vmatpush1.msra.mxu0 %v89
    %213 = vmatprep.subr.mxu0 %v94
    %214 = vmatpush1.msra.mxu0 %v93
    %215 = vmatprep.subr.mxu0 %v98
    %216 = vmatpush1.msra.mxu0 %v97
    %217 = vmatprep.subr.mxu0 %v102
    %218 = vmatpush1.msra.mxu0 %v101
    %219 = vmatprep.subr.mxu0 %v106
    %220 = vmatpush1.msra.mxu0 %v105
    %221 = vmatprep.subr.mxu0 %v110
    %222 = vmatpush1.msra.mxu0 %v109
    %223 = vmatprep.subr.mxu0 %v114
    %224 = vmatpush1.msra.mxu0 %v113
    %225 = vmatprep.subr.mxu0 %v118
    %226 = vmatpush1.msra.mxu0 %v117
    %227 = vmatprep.subr.mxu0 %v122
    %228 = vmatpush1.msra.mxu0 %v121
    %229 = vmatprep.subr.mxu0 %v126
    %230 = vmatpush1.msra.mxu0 %v125
    %231 = vmatprep.subr.mxu0 %v130
    %232 = vmatpush1.msra.mxu0 %v129
    %233 = vmatprep.subr.mxu0 %v134
    %234 = vmatpush1.msra.mxu0 %v133
    %235 = vmatprep.subr.mxu0 %v138
    %236 = vmatpush1.msra.mxu0 %v137
    %237 = vmatprep.subr.mxu0 %v142
    %238 = vmatpush1.msra.mxu0 %v141
    %239 = vmatprep.subr.mxu0 %v146
    %240 = vmatpush1.msra.mxu0 %v145
    %241 = vmatprep.subr.mxu0 %v150
    %242 = vmatpush1.msra.mxu0 %v149
    %243 = vmatprep.subr.mxu0 %v154
    %244 = vmatpush1.msra.mxu0 %v153
    %245 = vmatprep.subr.mxu0 %v158
    %246 = vmatpush1.msra.mxu0 %v157
    %247 = vmatprep.subr.mxu0 %v162
    %248 = vmatpush1.msra.mxu0 %v161
    %249 = vmatprep.subr.mxu0 %v166
    %250 = vmatpush1.msra.mxu0 %v165
    %251 = vmatprep.subr.mxu0 %v170
    %252 = vmatpush1.msra.mxu0 %v169
    %253 = vmatprep.subr.mxu0 %v174
    %254 = vmatpush1.msra.mxu0 %v173
    %255 = vmatprep.subr.mxu0 %v178
    %256 = vmatpush1.msra.mxu0 %v177
    %257 = vmatprep.subr.mxu0 %v182
    %258 = vmatpush1.msra.mxu0 %v181
    %259 = vmatprep.subr.mxu0 %v186
    %260 = vmatpush1.msra.mxu0 %v185
    %261 = vmatprep.subr.mxu0 %v190
    %262 = vmatpush1.msra.mxu0 %v189
    %263 = vmatprep.subr.mxu0 %v194
    %264 = vmatpush1.msra.mxu0 %v193
    %265 = vmatprep.subr.mxu0 %v198
    %266 = vmatpush1.msra.mxu0 %v197
    %267 = vmatprep.subr.mxu0 %v202
    %268 = vmatpush1.msra.mxu0 %v201
    %269 = vmatprep.mubr.f32.mxu0 %v76
    %270 = vmatmul.mubr.f32.gmra.mrb[0].mxu0 %v75
    %v271 = vpop.f32.mrb[0].mxu0
    %v272 = vadd.f32 0.0, %v271
    %v273 = vpop.f32.mrb[0].mxu0
    %v274 = vadd.f32 0.0, %v273
    %275 = vdwg.mxu0
    %276 = vmatprep.subr.mxu0 %v80
    %277 = vmatpush1.msra.mxu0 %v79
    %278 = vmatprep.subr.mxu0 %v84
    %279 = vmatpush1.msra.mxu0 %v83
    %280 = vmatprep.subr.mxu0 %v88
    %281 = vmatpush1.msra.mxu0 %v87
    %282 = vmatprep.subr.mxu0 %v92
    %283 = vmatpush1.msra.mxu0 %v91
    %284 = vmatprep.subr.mxu0 %v96
    %285 = vmatpush1.msra.mxu0 %v95
    %286 = vmatprep.subr.mxu0 %v100
    %287 = vmatpush1.msra.mxu0 %v99
    %288 = vmatprep.subr.mxu0 %v104
    %289 = vmatpush1.msra.mxu0 %v103
    %290 = vmatprep.subr.mxu0 %v108
    %291 = vmatpush1.msra.mxu0 %v107
    %292 = vmatprep.subr.mxu0 %v112
    %293 = vmatpush1.msra.mxu0 %v111
    %294 = vmatprep.subr.mxu0 %v116
    %295 = vmatpush1.msra.mxu0 %v115
    %296 = vmatprep.subr.mxu0 %v120
    %297 = vmatpush1.msra.mxu0 %v119
    %298 = vmatprep.subr.mxu0 %v124
    %299 = vmatpush1.msra.mxu0 %v123
    %300 = vmatprep.subr.mxu0 %v128
    %301 = vmatpush1.msra.mxu0 %v127
    %302 = vmatprep.subr.mxu0 %v132
    %303 = vmatpush1.msra.mxu0 %v131
    %304 = vmatprep.subr.mxu0 %v136
    %305 = vmatpush1.msra.mxu0 %v135
    %306 = vmatprep.subr.mxu0 %v140
    %307 = vmatpush1.msra.mxu0 %v139
    %308 = vmatprep.subr.mxu0 %v144
    %309 = vmatpush1.msra.mxu0 %v143
    %310 = vmatprep.subr.mxu0 %v148
    %311 = vmatpush1.msra.mxu0 %v147
    %312 = vmatprep.subr.mxu0 %v152
    %313 = vmatpush1.msra.mxu0 %v151
    %314 = vmatprep.subr.mxu0 %v156
    %315 = vmatpush1.msra.mxu0 %v155
    %316 = vmatprep.subr.mxu0 %v160
    %317 = vmatpush1.msra.mxu0 %v159
    %318 = vmatprep.subr.mxu0 %v164
    %319 = vmatpush1.msra.mxu0 %v163
    %320 = vmatprep.subr.mxu0 %v168
    %321 = vmatpush1.msra.mxu0 %v167
    %322 = vmatprep.subr.mxu0 %v172
    %323 = vmatpush1.msra.mxu0 %v171
    %324 = vmatprep.subr.mxu0 %v176
    %325 = vmatpush1.msra.mxu0 %v175
    %326 = vmatprep.subr.mxu0 %v180
    %327 = vmatpush1.msra.mxu0 %v179
    %328 = vmatprep.subr.mxu0 %v184
    %329 = vmatpush1.msra.mxu0 %v183
    %330 = vmatprep.subr.mxu0 %v188
    %331 = vmatpush1.msra.mxu0 %v187
    %332 = vmatprep.subr.mxu0 %v192
    %333 = vmatpush1.msra.mxu0 %v191
    %334 = vmatprep.subr.mxu0 %v196
    %335 = vmatpush1.msra.mxu0 %v195
    %336 = vmatprep.subr.mxu0 %v200
    %337 = vmatpush1.msra.mxu0 %v199
    %338 = vmatprep.subr.mxu0 %v204
    %339 = vmatpush1.msra.mxu0 %v203
    %340 = vmatprep.mubr.f32.mxu0 %v76
    %341 = vmatmul.mubr.f32.gmra.mrb[0].mxu0 %v75
    %v342 = vpop.f32.mrb[0].mxu0
    %v343 = vadd.f32 0.0, %v342
    %v344 = vpop.f32.mrb[0].mxu0
    %v345 = vadd.f32 0.0, %v344
    %346 = vdwg.mxu0
    %v347 = vmul.f32 %v272, %v272
    %v348 = vmul.f32 %v274, %v274
    %v349 = vmul.f32 %v343, %v343
    %v350 = vmul.f32 %v345, %v345
    %v351 = vadd.f32 %v347, %v349
    %v352 = vadd.f32 %v348, %v350
    %v353 = vrsqrt.pop %v351
    %v354 = vmul.f32 %v351, %v353
    %vm355 = vcmp.eq.f32.partialorder %v351, inf
    %v356 = vsel %vm355, %v351, %v354
    %vm357 = vcmp.eq.f32.partialorder %v351, 0.0
    %v358 = vand.u32 %v351, 2147483648
    %v359 = vsel %vm357, %v358, %v356
    %v360 = vrsqrt.pop %v352
    %v361 = vmul.f32 %v352, %v360
    %vm362 = vcmp.eq.f32.partialorder %v352, inf
    %v363 = vsel %vm362, %v352, %v361
    %vm364 = vcmp.eq.f32.partialorder %v352, 0.0
    %v365 = vand.u32 %v352, 2147483648
    %v366 = vsel %vm364, %v365, %v363
    %v367 = vld [vmem:[#allocation8] sm:$0x3]
    %v368 = vrot.slane %v359, 4
    %v369 = vadd.f32 %v359, %v368
    %v370 = vrot.slane %v369, 2
    %v371 = vadd.f32 %v369, %v370
    %v372 = vrot.slane %v371, 1
    %v373 = vadd.f32 %v371, %v372
    %v374 = vrot.slane %v366, 4
    %v375 = vadd.f32 %v366, %v374
    %v376 = vrot.slane %v375, 2
    %v377 = vadd.f32 %v375, %v376
    %v378 = vrot.slane %v377, 1
    %v379 = vadd.f32 %v377, %v378
    %v382 = vcombine.low %v373, %v379
    %v384 = vunpack.c.l.s4 1966171168
    %v385 = vunpack.c.0.s8 %v384
    %v386 = vlaneseq
    %v387 = vshrl.u32 %v386, 7
    %v388 = vsub.s32 %v385, %v387
    %v389 = vrot.slane %v382, %v388
    %v391 = vunpack.c.l.s4 1966171168
    %v392 = vunpack.c.0.s8 %v391
    %v393 = vlaneseq
    %v394 = vshrl.u32 %v393, 7
    %v395 = vsub.s32 %v392, %v394
    %v396 = vrot.slane %v389, %v395
    %v398 = vadd.f32 %v367, %v396
    %v399 = vlaneseq
    %vm400 = vcmp.ge.s32.totalorder %v399, 0
    %vm401 = vcmp.lt.s32.totalorder %v399, 256
    %vm402 = vmand %vm400, %vm401
    %403 = vst.msk [vmem:[#allocation8] sm:$0x3] %vm402, %v398
    // Predicated region
    $region30: #{tpu_custom_call.1} parent=1 // pred_check
      _
    $region31: #{tpu_custom_call.1} parent=1 // pred_check_branch
      %405 = sbr.rel (0) target = $region33
    $region32: #{tpu_custom_call.1} parent=1 // pred_region
      %s407 = ssub.s32 32, 32
      %408 = vsyncadd [#allocation4], %s407
      %s410 = sshll.u32 [#allocation8], 4
      %s411 = int_to_ptr.vmem [resolvable:$true] %s410
      %413 = dma.vmem_to_hbm [thread:$0]  %s411, 32, %s3, [#allocation4]
    $region33: #{tpu_custom_call.1} parent=1 // pred_fallthru
      _
    // Predicated region
    $region34: #{tpu_custom_call.1} parent=1 // pred_check
      _
    $region35: #{tpu_custom_call.1} parent=1 // pred_check_branch
      %415 = sbr.rel (0) target = $region37
    $region36: #{tpu_custom_call.1} parent=1 // pred_region
      %416 = dma.done [#allocation4], 32
    $region37: #{tpu_custom_call.1} parent=1 // pred_fallthru
      _
    %417 = vsyncpa [#allocation3], 1
    %418 = vsyncpa [#allocation6], 1
    %419 = vsyncpa [#allocation4], 1

</llo_original>
